<compile_context>
chip_gen: v7x
topology: tpu7x:2x2x1
jax: 0.10.0
libtpu: 0.0.40
codegen_flags: <defaults>
</compile_context>

<pallas_src>
import jax
import jax.numpy as jnp
from jax.experimental import pallas as pl
from jax.experimental.pallas import tpu as pltpu


def _round_up(n: int, m: int) -> int:
    return ((n + m - 1) // m) * m


def _fused_model_kernel(x_ref, w1_ref, b1_ref, w2_ref, b2_ref, w3_ref, b3_ref, o_ref):
    # body block: Linear(D -> H) + ReLU.  x arrives f32; the bf16 cast happens here
    # (cheap VPU op hidden under DMA/MXU slack) instead of as a wrapper HBM pass.
    x = x_ref[...].astype(jnp.bfloat16)                         # (TM, D)
    h1 = jnp.dot(x, w1_ref[...], preferred_element_type=jnp.float32)
    h1 = jnp.maximum(h1 + b1_ref[...], 0.0)                     # (TM, H) f32

    # task_block: Linear(H -> H) + ReLU  (bf16 MXU, f32 accumulate + epilogue)
    h2 = jnp.dot(h1.astype(jnp.bfloat16), w2_ref[...],
                 preferred_element_type=jnp.float32)
    h2 = jnp.maximum(h2 + b2_ref[...], 0.0)                     # (TM, H) f32

    # pre (prediction head): Linear(H -> 1) + sigmoid.  out_features == 1, so it is
    # a VPU broadcast-mul + XLU lane reduction rather than a 1-useful-column MXU pass.
    logits = jnp.sum(h2 * w3_ref[...], axis=-1) + b3_ref[0]     # (TM,)
    # Relayout lane-dense *before* the transcendentals: sigmoid then touches ~TM/128
    # dense vregs and the store is an unmasked, contiguous row.
    logits = logits.reshape(1, 1, -1)                           # (1, 1, TM)
    # sigmoid = 1 / (1 + exp(-x)); exp and the approx reciprocal both go to the EUP.
    o_ref[...] = pl.reciprocal(1.0 + jnp.exp(-logits), approx=True)


def prepare_params(params):
    """One-time parameter prep (hoisted off the per-call hot path).

    Pads the hidden dim to a multiple of 128 lanes (zero-pad preserves semantics:
    padded columns stay exactly 0 through both ReLUs and contribute 0 to the final
    dot), casts matmul weights to bf16, lays w3 out as a (1, H) broadcast row and
    b3 as a 1-element SMEM scalar.
    """
    w1, b1, w2, b2, w3, b3 = params
    d_in, hidden = w1.shape
    h_pad = _round_up(hidden, 128)
    pad = h_pad - hidden

    b1 = jnp.reshape(b1, (1, hidden))
    b2 = jnp.reshape(b2, (1, hidden))
    w3 = jnp.reshape(w3, (hidden, 1))
    if pad:
        w1 = jnp.pad(w1, ((0, 0), (0, pad)))
        b1 = jnp.pad(b1, ((0, 0), (0, pad)))
        w2 = jnp.pad(w2, ((0, pad), (0, pad)))
        b2 = jnp.pad(b2, ((0, 0), (0, pad)))
        w3 = jnp.pad(w3, ((0, pad), (0, 0)))

    return (
        w1.astype(jnp.bfloat16),                       # (D, H)   MXU operand
        b1.astype(jnp.float32),                        # (1, H)
        w2.astype(jnp.bfloat16),                       # (H, H)   MXU operand
        b2.astype(jnp.float32),                        # (1, H)
        jnp.reshape(w3, (1, h_pad)).astype(jnp.float32),  # (1, H) broadcast row
        jnp.reshape(b3, (1,)).astype(jnp.float32),     # scalar -> SMEM
    )


def model_forward(x, prepped_params, *, block_rows=2048):
    """Fused Model.forward as a single batch-tiled Pallas kernel.

    `x` stays in its native dtype (no wrapper cast/pad); `prepped_params` must come
    from prepare_params().  Rows of the trailing partial tile beyond B contain
    unspecified values inside the kernel; they are row-independent and sliced off.
    """
    w1, b1, w2, b2, w3_row, b3_s = prepped_params
    B, D = x.shape
    H = w1.shape[1]
    assert w1.shape[0] == D, (w1.shape, D)
    assert block_rows % 16 == 0

    # Batch tile: multiple of 16 rows (bf16 sublane packing of the in-kernel cast).
    TM = min(block_rows, _round_up(B, 16))
    # Ensure >= 2 balanced grid steps when B allows it, so the "parallel" axis
    # actually uses both TensorCores on v7x (no-op on single-TC v5e/v6e).
    if B > 16 and pl.cdiv(B, TM) < 2:
        TM = _round_up(pl.cdiv(B, 2), 16)
    n_tiles = pl.cdiv(B, TM)

    rows = n_tiles * TM
    flops = int(2 * rows * (D * H + H * H + H))
    bytes_acc = int(B * D * x.dtype.itemsize
                    + (D * H + H * H) * 2          # bf16 weights
                    + (3 * H + 1) * 4              # biases + w3 row + b3
                    + rows * 4)                    # lane-dense output

    out = pl.pallas_call(
        _fused_model_kernel,
        out_shape=jax.ShapeDtypeStruct((n_tiles, 1, TM), jnp.float32),
        grid=(n_tiles,),
        in_specs=[
            pl.BlockSpec((TM, D), lambda i: (i, 0)),            # x: pipelined over batch
            pl.BlockSpec((D, H), lambda i: (0, 0)),             # w1: VMEM-resident
            pl.BlockSpec((1, H), lambda i: (0, 0)),             # b1
            pl.BlockSpec((H, H), lambda i: (0, 0)),             # w2
            pl.BlockSpec((1, H), lambda i: (0, 0)),             # b2
            pl.BlockSpec((1, H), lambda i: (0, 0)),             # w3 (row layout)
            pl.BlockSpec(memory_space=pltpu.MemorySpace.SMEM),  # b3 scalar
        ],
        out_specs=pl.BlockSpec((1, 1, TM), lambda i: (i, 0, 0)),  # lane-dense rows
        compiler_params=pltpu.CompilerParams(
            dimension_semantics=("parallel",)),                 # 2x on v7x dual-TC
        cost_estimate=pl.CostEstimate(
            flops=flops, transcendentals=int(rows), bytes_accessed=bytes_acc),
    )(x, w1, b1, w2, b2, w3_row, b3_s)

    # (n_tiles, 1, TM) -> (B, 1); discards the unspecified trailing-tile rows.
    return out.reshape(-1)[:B].reshape(B, 1)


def init_params(key, d_in, hidden):
    """Deterministic synthetic parameters (shapes implied by body/task_block/pre)."""
    k1, k2, k3 = jax.random.split(key, 3)
    w1 = jax.random.normal(k1, (d_in, hidden), jnp.float32) * 0.1
    b1 = jnp.zeros((1, hidden), jnp.float32)
    w2 = jax.random.normal(k2, (hidden, hidden), jnp.float32) * 0.1
    b2 = jnp.zeros((1, hidden), jnp.float32)
    w3 = jax.random.normal(k3, (hidden, 1), jnp.float32) * 0.1
    b3 = jnp.zeros((1, 1), jnp.float32)
    return (w1, b1, w2, b2, w3, b3)


def _reference(x, params):
    w1, b1, w2, b2, w3, b3 = params
    h1 = jnp.maximum(x @ w1 + b1, 0.0)
    h2 = jnp.maximum(h1 @ w2 + b2, 0.0)
    return jax.nn.sigmoid(h2 @ w3 + b3)


if __name__ == "__main__":
    # Small shapes. Two configs are exercised: block_rows=16 (3 exact tiles, hidden
    # pad 64 -> 128) and the default (TM capped to ~B/2 -> 2 tiles, one partial
    # trailing block with unspecified padding rows that get sliced off).
    B, D_IN, HIDDEN = 48, 32, 64

    key = jax.random.PRNGKey(0)
    k_x, k_p = jax.random.split(key)
    x = jax.random.normal(k_x, (B, D_IN), jnp.float32)
    params = init_params(k_p, D_IN, HIDDEN)
    prepped = jax.block_until_ready(prepare_params(params))   # one-time prep

    fwd = jax.jit(model_forward, static_argnames=("block_rows",))

    out_small = jax.block_until_ready(fwd(x, prepped, block_rows=16))
    out_default = jax.block_until_ready(fwd(x, prepped, block_rows=2048))

    ref = _reference(x, params)
    for out in (out_small, out_default):
        assert out.shape == (B, 1), out.shape
        # bf16 matmul operands + approx reciprocal -> loosened tolerance vs f32 ref.
        err = float(jnp.max(jnp.abs(out - ref)))
        assert jnp.allclose(out, ref, atol=2e-2, rtol=2e-2), err

    # TODO(synk): loss/metric bookkeeping (compute_loss, calculate_metrics, fit/
    # evaluate) and multi-head/multi-task dict aggregation are training-time host
    # logic and are not part of the forward-pass kernel.
    print("KERNEL_OK")
</pallas_src>

<mosaic_0001>
module attributes {stable_mosaic.version = 11 : i64} {
  func.func @_fused_model_kernel(%arg0: i32, %arg1: memref<16x32xf32, #tpu.memory_space<vmem>>, %arg2: memref<32x128xbf16, #tpu.memory_space<vmem>>, %arg3: memref<1x128xf32, #tpu.memory_space<vmem>>, %arg4: memref<128x128xbf16, #tpu.memory_space<vmem>>, %arg5: memref<1x128xf32, #tpu.memory_space<vmem>>, %arg6: memref<1x128xf32, #tpu.memory_space<vmem>>, %arg7: memref<1xf32, #tpu.memory_space<smem>>, %arg8: memref<1x1x16xf32, #tpu.memory_space<vmem>>) attributes {dimension_semantics = [#tpu.dimension_semantics<parallel>], iteration_bounds = array<i64: 3>, scalar_prefetch = 0 : i64, scratch_operands = 0 : i64, tpu.core_type = #tpu.core_type<tc>, window_params = [{transform_indices = @transform_0, window_bounds = array<i64: 16, 32>}, {pipeline_mode = #tpu.pipeline_mode<synchronous>, transform_indices = @transform_1, window_bounds = array<i64: 32, 128>}, {pipeline_mode = #tpu.pipeline_mode<synchronous>, transform_indices = @transform_2, window_bounds = array<i64: 1, 128>}, {pipeline_mode = #tpu.pipeline_mode<synchronous>, transform_indices = @transform_3, window_bounds = array<i64: 128, 128>}, {pipeline_mode = #tpu.pipeline_mode<synchronous>, transform_indices = @transform_4, window_bounds = array<i64: 1, 128>}, {pipeline_mode = #tpu.pipeline_mode<synchronous>, transform_indices = @transform_5, window_bounds = array<i64: 1, 128>}, {transform_indices = @transform_6, window_bounds = array<i64: 1>}, {transform_indices = @transform_7, window_bounds = array<i64: 1, 1, 16>}]} {
    %c0 = arith.constant 0 : index
    %c0_0 = arith.constant 0 : index
    %0 = vector.load %arg1[%c0, %c0_0] : memref<16x32xf32, #tpu.memory_space<vmem>>, vector<16x32xf32>
    %1 = arith.truncf %0 : vector<16x32xf32> to vector<16x32xbf16>
    %c0_1 = arith.constant 0 : index
    %c0_2 = arith.constant 0 : index
    %2 = vector.load %arg2[%c0_1, %c0_2] : memref<32x128xbf16, #tpu.memory_space<vmem>>, vector<32x128xbf16>
    %cst = arith.constant dense<0.000000e+00> : vector<16x128xf32>
    %3 = tpu.matmul %1, %2, %cst {dimension_numbers = #tpu.dot_dimension_numbers<[1], [0], [0], [1], [0, 0, 1, 1], [], []>} : vector<16x32xbf16>, vector<32x128xbf16>, vector<16x128xf32> -> vector<16x128xf32>
    %c0_3 = arith.constant 0 : index
    %c0_4 = arith.constant 0 : index
    %4 = vector.load %arg3[%c0_3, %c0_4] : memref<1x128xf32, #tpu.memory_space<vmem>>, vector<1x128xf32>
    %5 = vector.broadcast %4 : vector<1x128xf32> to vector<16x128xf32>
    %6 = arith.addf %3, %5 : vector<16x128xf32>
    %cst_5 = arith.constant 0.000000e+00 : f32
    %7 = vector.broadcast %cst_5 : f32 to vector<16x128xf32>
    %8 = arith.maximumf %6, %7 : vector<16x128xf32>
    %9 = arith.truncf %8 : vector<16x128xf32> to vector<16x128xbf16>
    %c0_6 = arith.constant 0 : index
    %c0_7 = arith.constant 0 : index
    %10 = vector.load %arg4[%c0_6, %c0_7] : memref<128x128xbf16, #tpu.memory_space<vmem>>, vector<128x128xbf16>
    %cst_8 = arith.constant dense<0.000000e+00> : vector<16x128xf32>
    %11 = tpu.matmul %9, %10, %cst_8 {dimension_numbers = #tpu.dot_dimension_numbers<[1], [0], [0], [1], [0, 0, 1, 1], [], []>} : vector<16x128xbf16>, vector<128x128xbf16>, vector<16x128xf32> -> vector<16x128xf32>
    %c0_9 = arith.constant 0 : index
    %c0_10 = arith.constant 0 : index
    %12 = vector.load %arg5[%c0_9, %c0_10] : memref<1x128xf32, #tpu.memory_space<vmem>>, vector<1x128xf32>
    %13 = vector.broadcast %12 : vector<1x128xf32> to vector<16x128xf32>
    %14 = arith.addf %11, %13 : vector<16x128xf32>
    %cst_11 = arith.constant 0.000000e+00 : f32
    %15 = vector.broadcast %cst_11 : f32 to vector<16x128xf32>
    %16 = arith.maximumf %14, %15 : vector<16x128xf32>
    %c0_12 = arith.constant 0 : index
    %c0_13 = arith.constant 0 : index
    %17 = vector.load %arg6[%c0_12, %c0_13] : memref<1x128xf32, #tpu.memory_space<vmem>>, vector<1x128xf32>
    %18 = vector.broadcast %17 : vector<1x128xf32> to vector<16x128xf32>
    %19 = arith.mulf %16, %18 : vector<16x128xf32>
    %cst_14 = arith.constant dense<0.000000e+00> : vector<16xf32>
    %20 = vector.multi_reduction <add>, %19, %cst_14 [1] : vector<16x128xf32> to vector<16xf32>
    %c0_15 = arith.constant 0 : index
    %21 = memref.load %arg7[%c0_15] : memref<1xf32, #tpu.memory_space<smem>>
    %22 = vector.broadcast %21 : f32 to vector<16xf32>
    %23 = arith.addf %20, %22 : vector<16xf32>
    %24 = vector.shape_cast %23 : vector<16xf32> to vector<1x1x16xf32>
    %cst_16 = arith.constant 0.000000e+00 : f32
    %25 = vector.broadcast %cst_16 : f32 to vector<1x1x16xf32>
    %26 = arith.subf %25, %24 : vector<1x1x16xf32>
    %27 = math.exp %26 : vector<1x1x16xf32>
    %cst_17 = arith.constant 1.000000e+00 : f32
    %28 = vector.broadcast %cst_17 : f32 to vector<1x1x16xf32>
    %29 = arith.addf %28, %27 : vector<1x1x16xf32>
    %30 = tpu.reciprocal %29 {approx = true} : vector<1x1x16xf32> -> vector<1x1x16xf32>
    %c0_18 = arith.constant 0 : index
    %c0_19 = arith.constant 0 : index
    %c0_20 = arith.constant 0 : index
    %31 = vector.load %arg8[%c0_18, %c0_19, %c0_20] : memref<1x1x16xf32, #tpu.memory_space<vmem>>, vector<1x1x16xf32>
    tpu.vector_store %arg8[%c0_18, %c0_19, %c0_20], %30 {strides = array<i32>} : memref<1x1x16xf32, #tpu.memory_space<vmem>>, vector<1x1x16xf32>,
    return
  }
  func.func @transform_0(%arg0: i32) -> (i32, i32) {
    %c0_i32 = arith.constant 0 : i32
    %c0_i32_0 = arith.constant 0 : i32
    return %arg0, %c0_i32 : i32, i32
  }
  func.func @transform_1(%arg0: i32) -> (i32, i32) {
    %c0_i32 = arith.constant 0 : i32
    %c0_i32_0 = arith.constant 0 : i32
    %c0_i32_1 = arith.constant 0 : i32
    return %c0_i32, %c0_i32_0 : i32, i32
  }
  func.func @transform_2(%arg0: i32) -> (i32, i32) {
    %c0_i32 = arith.constant 0 : i32
    %c0_i32_0 = arith.constant 0 : i32
    %c0_i32_1 = arith.constant 0 : i32
    return %c0_i32, %c0_i32_0 : i32, i32
  }
  func.func @transform_3(%arg0: i32) -> (i32, i32) {
    %c0_i32 = arith.constant 0 : i32
    %c0_i32_0 = arith.constant 0 : i32
    %c0_i32_1 = arith.constant 0 : i32
    return %c0_i32, %c0_i32_0 : i32, i32
  }
  func.func @transform_4(%arg0: i32) -> (i32, i32) {
    %c0_i32 = arith.constant 0 : i32
    %c0_i32_0 = arith.constant 0 : i32
    %c0_i32_1 = arith.constant 0 : i32
    return %c0_i32, %c0_i32_0 : i32, i32
  }
  func.func @transform_5(%arg0: i32) -> (i32, i32) {
    %c0_i32 = arith.constant 0 : i32
    %c0_i32_0 = arith.constant 0 : i32
    %c0_i32_1 = arith.constant 0 : i32
    return %c0_i32, %c0_i32_0 : i32, i32
  }
  func.func @transform_6(%arg0: i32) -> i32 {
    %c0_i32 = arith.constant 0 : i32
    %c0_i32_0 = arith.constant 0 : i32
    return %c0_i32 : i32
  }
  func.func @transform_7(%arg0: i32) -> (i32, i32, i32) {
    %c0_i32 = arith.constant 0 : i32
    %c0_i32_0 = arith.constant 0 : i32
    %c0_i32_1 = arith.constant 0 : i32
    return %arg0, %c0_i32, %c0_i32_0 : i32, i32, i32
  }
}

</mosaic_0001>

<llo_original>
// kernel: model_forward.1
$region0: #{model_forward.1}
  #allocation0 [shape = 'u32[]', space=smem, size = 0x4, offset = 0x4, fixed_abs, tag = 'smem constant byte address 0x4 - core index']
  #allocation1 [shape = 'u32[144,128]{1,0:T(1,128)}', space=vmem, size = 0x12000, scoped, tag = 'internal scratch']
  #allocation2 [shape = 'f32[1]{0:T(128)S(6)}', space=smem, size = 0x200, scoped, tag = 'scoped memory for model_forward.1']
  %s0 = inlined_call_operand.vmem [shape: f32[48,32], index: 0, kind: input, shape index: {}]
  %s1 = inlined_call_operand.vmem [shape: bf16[32,128], index: 1, kind: input, shape index: {}]
  %s2 = inlined_call_operand.vmem [shape: f32[1,128], index: 2, kind: input, shape index: {}]
  %s3 = inlined_call_operand.vmem [shape: bf16[128,128], index: 3, kind: input, shape index: {}]
  %s4 = inlined_call_operand.vmem [shape: f32[1,128], index: 4, kind: input, shape index: {}]
  %s5 = inlined_call_operand.vmem [shape: f32[1,128], index: 5, kind: input, shape index: {}]
  %s6 = inlined_call_operand.<no memory space> [shape: f32[1], index: 6, kind: input, shape index: {}]
  %s7 = inlined_call_operand.vmem [shape: f32[3,1,16], index: 7, kind: output, shape index: {}]
  %s8 = sld [smem:[#allocation0]]
  $region61: #{model_forward.1} parent=0
    _
  %s10 = ssub.s32 1, %s8
  %s11 = scalar_select 0, %s10, %s8
  %12 = sst [smem:[#allocation2]] %s6
  loop: start=0, step=1, limit=5
  $region2: #{model_forward.1} parent=0 // loop_pre_header
    _
  $region3: #{model_forward.1} parent=0 // loop_header
    %s14 = sphi 0, %s18
    %p15 = scmp.ge.s32.totalorder %s14, 5
    %s24 = sphi 0, %s26
    %s27 = sphi 0, %s24
    %s28 = sphi 0, %s27
    %s44 = sphi 0, %s28
    %s48 = sphi 0, %s48
    %s50 = sphi 0, %s48
    %s51 = sphi 0, %s50
    %s65 = sphi 0, %s51
    %s69 = sphi 0, %s69
    %s71 = sphi 0, %s69
    %s72 = sphi 0, %s71
    %s86 = sphi 0, %s72
    %s90 = sphi 0, %s90
    %s92 = sphi 0, %s90
    %s93 = sphi 0, %s92
    %s107 = sphi 0, %s93
    %s111 = sphi 0, %s111
    %s113 = sphi 0, %s111
    %s114 = sphi 0, %s113
    %s128 = sphi 0, %s114
    %s132 = sphi 0, %s132
    %s134 = sphi 0, %s132
    %s135 = sphi 0, %s134
    %s149 = sphi 0, %s135
    %s153 = sphi 0, %s153
    %s155 = sphi 0, %s153
    %s156 = sphi 0, %s155
    %s170 = sphi 0, %s156
    %s176 = sphi 0, %s178
    %s179 = sphi 0, %s176
    %s180 = sphi 0, %s179
    %s196 = sphi 0, %s180
  $region4: #{model_forward.1} parent=0 // loop_header_branch
    %17 = sbr.rel (%p15) target = $region8
  $region5: #{model_forward.1} parent=0 // loop_body
    %s19 = ssub.s32 %s14, 1
    %s20 = ssub.s32 %s14, 2
    %s21 = sadd.s32 %s14, 1
    %s22 = ssub.s32 %s14, %s21
    %p23 = scmp.eq.s32.totalorder %s22, 0
    %s25 = sadd.s32 %s24, 1
    %s26 = scalar_select %p23, %s24, %s25
    %p29 = pneg %p23
    %p30 = scmp.eq.s32.totalorder %s14, 2
    %p31 = por %p29, %p30
    %p32 = scmp.ne.s32.totalorder %s24, %s27
    %p33 = scmp.eq.s32.totalorder %s14, 0
    %p34 = por %p32, %p33
    %p35 = scmp.ne.s32.totalorder %s24, %s27
    %p36 = scmp.eq.s32.totalorder %s19, 2
    %p37 = por %p35, %p36
    %p38 = scmp.ne.s32.totalorder %s27, %s28
    %p39 = scmp.eq.s32.totalorder %s19, 0
    %p40 = por %p38, %p39
    %p41 = scmp.ne.s32.totalorder %s27, %s28
    %p42 = scmp.eq.s32.totalorder %s20, 2
    %p43 = por %p41, %p42
    %p45 = scmp.ne.s32.totalorder %s28, %s44
    %p46 = scmp.eq.s32.totalorder %s20, 0
    %p47 = por %p45, %p46
    %s49 = sadd.s32 %s48, 1
    %p52 = scmp.eq.s32.totalorder %s14, 2
    %p53 = scmp.ne.s32.totalorder %s48, %s50
    %p54 = scmp.eq.s32.totalorder %s14, 0
    %p55 = por %p53, %p54
    %p56 = scmp.ne.s32.totalorder %s48, %s50
    %p57 = scmp.eq.s32.totalorder %s19, 2
    %p58 = por %p56, %p57
    %p59 = scmp.ne.s32.totalorder %s50, %s51
    %p60 = scmp.eq.s32.totalorder %s19, 0
    %p61 = por %p59, %p60
    %p62 = scmp.ne.s32.totalorder %s50, %s51
    %p63 = scmp.eq.s32.totalorder %s20, 2
    %p64 = por %p62, %p63
    %p66 = scmp.ne.s32.totalorder %s51, %s65
    %p67 = scmp.eq.s32.totalorder %s20, 0
    %p68 = por %p66, %p67
    %s70 = sadd.s32 %s69, 1
    %p73 = scmp.eq.s32.totalorder %s14, 2
    %p74 = scmp.ne.s32.totalorder %s69, %s71
    %p75 = scmp.eq.s32.totalorder %s14, 0
    %p76 = por %p74, %p75
    %p77 = scmp.ne.s32.totalorder %s69, %s71
    %p78 = scmp.eq.s32.totalorder %s19, 2
    %p79 = por %p77, %p78
    %p80 = scmp.ne.s32.totalorder %s71, %s72
    %p81 = scmp.eq.s32.totalorder %s19, 0
    %p82 = por %p80, %p81
    %p83 = scmp.ne.s32.totalorder %s71, %s72
    %p84 = scmp.eq.s32.totalorder %s20, 2
    %p85 = por %p83, %p84
    %p87 = scmp.ne.s32.totalorder %s72, %s86
    %p88 = scmp.eq.s32.totalorder %s20, 0
    %p89 = por %p87, %p88
    %s91 = sadd.s32 %s90, 1
    %p94 = scmp.eq.s32.totalorder %s14, 2
    %p95 = scmp.ne.s32.totalorder %s90, %s92
    %p96 = scmp.eq.s32.totalorder %s14, 0
    %p97 = por %p95, %p96
    %p98 = scmp.ne.s32.totalorder %s90, %s92
    %p99 = scmp.eq.s32.totalorder %s19, 2
    %p100 = por %p98, %p99
    %p101 = scmp.ne.s32.totalorder %s92, %s93
    %p102 = scmp.eq.s32.totalorder %s19, 0
    %p103 = por %p101, %p102
    %p104 = scmp.ne.s32.totalorder %s92, %s93
    %p105 = scmp.eq.s32.totalorder %s20, 2
    %p106 = por %p104, %p105
    %p108 = scmp.ne.s32.totalorder %s93, %s107
    %p109 = scmp.eq.s32.totalorder %s20, 0
    %p110 = por %p108, %p109
    %s112 = sadd.s32 %s111, 1
    %p115 = scmp.eq.s32.totalorder %s14, 2
    %p116 = scmp.ne.s32.totalorder %s111, %s113
    %p117 = scmp.eq.s32.totalorder %s14, 0
    %p118 = por %p116, %p117
    %p119 = scmp.ne.s32.totalorder %s111, %s113
    %p120 = scmp.eq.s32.totalorder %s19, 2
    %p121 = por %p119, %p120
    %p122 = scmp.ne.s32.totalorder %s113, %s114
    %p123 = scmp.eq.s32.totalorder %s19, 0
    %p124 = por %p122, %p123
    %p125 = scmp.ne.s32.totalorder %s113, %s114
    %p126 = scmp.eq.s32.totalorder %s20, 2
    %p127 = por %p125, %p126
    %p129 = scmp.ne.s32.totalorder %s114, %s128
    %p130 = scmp.eq.s32.totalorder %s20, 0
    %p131 = por %p129, %p130
    %s133 = sadd.s32 %s132, 1
    %p136 = scmp.eq.s32.totalorder %s14, 2
    %p137 = scmp.ne.s32.totalorder %s132, %s134
    %p138 = scmp.eq.s32.totalorder %s14, 0
    %p139 = por %p137, %p138
    %p140 = scmp.ne.s32.totalorder %s132, %s134
    %p141 = scmp.eq.s32.totalorder %s19, 2
    %p142 = por %p140, %p141
    %p143 = scmp.ne.s32.totalorder %s134, %s135
    %p144 = scmp.eq.s32.totalorder %s19, 0
    %p145 = por %p143, %p144
    %p146 = scmp.ne.s32.totalorder %s134, %s135
    %p147 = scmp.eq.s32.totalorder %s20, 2
    %p148 = por %p146, %p147
    %p150 = scmp.ne.s32.totalorder %s135, %s149
    %p151 = scmp.eq.s32.totalorder %s20, 0
    %p152 = por %p150, %p151
    %s154 = sadd.s32 %s153, 1
    %p157 = scmp.eq.s32.totalorder %s14, 2
    %p158 = scmp.ne.s32.totalorder %s153, %s155
    %p159 = scmp.eq.s32.totalorder %s14, 0
    %p160 = por %p158, %p159
    %p161 = scmp.ne.s32.totalorder %s153, %s155
    %p162 = scmp.eq.s32.totalorder %s19, 2
    %p163 = por %p161, %p162
    %p164 = scmp.ne.s32.totalorder %s155, %s156
    %p165 = scmp.eq.s32.totalorder %s19, 0
    %p166 = por %p164, %p165
    %p167 = scmp.ne.s32.totalorder %s155, %s156
    %p168 = scmp.eq.s32.totalorder %s20, 2
    %p169 = por %p167, %p168
    %p171 = scmp.ne.s32.totalorder %s156, %s170
    %p172 = scmp.eq.s32.totalorder %s20, 0
    %p173 = por %p171, %p172
    %s174 = ssub.s32 %s14, %s21
    %p175 = scmp.eq.s32.totalorder %s174, 0
    %s177 = sadd.s32 %s176, 1
    %s178 = scalar_select %p175, %s176, %s177
    %p181 = pneg %p175
    %p182 = scmp.eq.s32.totalorder %s14, 2
    %p183 = por %p181, %p182
    %p184 = scmp.ne.s32.totalorder %s176, %s179
    %p185 = scmp.eq.s32.totalorder %s14, 0
    %p186 = por %p184, %p185
    %p187 = scmp.ne.s32.totalorder %s176, %s179
    %p188 = scmp.eq.s32.totalorder %s19, 2
    %p189 = por %p187, %p188
    %p190 = scmp.ne.s32.totalorder %s179, %s180
    %p191 = scmp.eq.s32.totalorder %s19, 0
    %p192 = por %p190, %p191
    %p193 = scmp.ne.s32.totalorder %s179, %s180
    %p194 = scmp.eq.s32.totalorder %s20, 2
    %p195 = por %p193, %p194
    %p197 = scmp.ne.s32.totalorder %s180, %s196
    %p198 = scmp.eq.s32.totalorder %s20, 0
    %p199 = por %p197, %p198
    %p200 = scmp.le.s32.totalorder 1, %s14
    %p201 = scmp.lt.s32.totalorder %s14, 4
    %p202 = pnand %p200, %p201
    %p203 = pneg %p202
    // Predicated region
    $region9: #{model_forward.1} parent=5 // pred_check
      _
    $region10: #{model_forward.1} parent=5 // pred_check_branch
      %205 = sbr.rel (%p202) target = $region12
    $region11: #{model_forward.1} parent=5 // pred_region
      %s206 = ssub.s32 %s14, 1
      // Predicated region
      $region13: #{model_forward.1} parent=11 // pred_check
        %p207 = pneg %p61
      $region14: #{model_forward.1} parent=11 // pred_check_branch
        %209 = sbr.rel (%p207) target = $region16
      $region15: #{model_forward.1} parent=11 // pred_region
        _
      $region16: #{model_forward.1} parent=11 // pred_fallthru
        _
      // Predicated region
      $region17: #{model_forward.1} parent=11 // pred_check
        %p210 = pneg %p82
      $region18: #{model_forward.1} parent=11 // pred_check_branch
        %212 = sbr.rel (%p210) target = $region20
      $region19: #{model_forward.1} parent=11 // pred_region
        _
      $region20: #{model_forward.1} parent=11 // pred_fallthru
        _
      // Predicated region
      $region21: #{model_forward.1} parent=11 // pred_check
        %p213 = pneg %p103
      $region22: #{model_forward.1} parent=11 // pred_check_branch
        %215 = sbr.rel (%p213) target = $region24
      $region23: #{model_forward.1} parent=11 // pred_region
        _
      $region24: #{model_forward.1} parent=11 // pred_fallthru
        _
      // Predicated region
      $region25: #{model_forward.1} parent=11 // pred_check
        %p216 = pneg %p124
      $region26: #{model_forward.1} parent=11 // pred_check_branch
        %218 = sbr.rel (%p216) target = $region28
      $region27: #{model_forward.1} parent=11 // pred_region
        _
      $region28: #{model_forward.1} parent=11 // pred_fallthru
        _
      // Predicated region
      $region29: #{model_forward.1} parent=11 // pred_check
        %p219 = pneg %p145
      $region30: #{model_forward.1} parent=11 // pred_check_branch
        %221 = sbr.rel (%p219) target = $region32
      $region31: #{model_forward.1} parent=11 // pred_region
        _
      $region32: #{model_forward.1} parent=11 // pred_fallthru
        _
      // Predicated region
      $region33: #{model_forward.1} parent=11 // pred_check
        %p222 = pneg %p166
      $region34: #{model_forward.1} parent=11 // pred_check_branch
        %224 = sbr.rel (%p222) target = $region36
      $region35: #{model_forward.1} parent=11 // pred_region
        _
      $region36: #{model_forward.1} parent=11 // pred_fallthru
        _
    $region12: #{model_forward.1} parent=5 // pred_fallthru
      _
    %p225 = scmp.lt.s32.totalorder %s14, 3
    // Predicated region
    $region37: #{model_forward.1} parent=5 // pred_check
      %p226 = pneg %p225
    $region38: #{model_forward.1} parent=5 // pred_check_branch
      %228 = sbr.rel (%p226) target = $region40
    $region39: #{model_forward.1} parent=5 // pred_region
      // Predicated region
      $region41: #{model_forward.1} parent=39 // pred_check
        %p229 = pneg %p34
      $region42: #{model_forward.1} parent=39 // pred_check_branch
        %231 = sbr.rel (%p229) target = $region44
      $region43: #{model_forward.1} parent=39 // pred_region
        %s232 = smul.u32 2, %s14
        %p233 = scmp.lt.s32.totalorder %s232, 5
        %s234 = scalar_select %p233, %s232, 5
        %s235 = smul.addr %s234, 8
        %s236 = scalar_lea.vmem %s0, %s235
        %s237 = smul.u32 2, %s14
      $region44: #{model_forward.1} parent=39 // pred_fallthru
        _
    $region40: #{model_forward.1} parent=5 // pred_fallthru
      _
    %p238 = scmp.le.s32.totalorder 1, %s14
    %p239 = scmp.lt.s32.totalorder %s14, 4
    %p240 = pnand %p238, %p239
    %p241 = pneg %p240
    // Predicated region
    $region45: #{model_forward.1} parent=5 // pred_check
      _
    $region46: #{model_forward.1} parent=5 // pred_check_branch
      %243 = sbr.rel (%p240) target = $region48
    $region47: #{model_forward.1} parent=5 // pred_region
      %s244 = ssub.s32 %s14, 1
      %s245 = smul.u32 2, %s19
      %p246 = scmp.lt.s32.totalorder %s245, 5
      %s247 = scalar_select %p246, %s245, 5
      %s248 = smul.addr %s247, 8
      %s249 = scalar_lea.vmem %s0, %s248
      %p250 = pneg %p40
      %p251 = pneg %p37
      %p252 = pneg %p61
      %p253 = pneg %p58
      %p254 = pneg %p82
      %p255 = pneg %p79
      %p256 = pneg %p103
      %p257 = pneg %p100
      %p258 = pneg %p124
      %p259 = pneg %p121
      %p260 = pneg %p145
      %p261 = pneg %p142
      %p262 = pneg %p166
      %p263 = pneg %p163
      %p264 = pneg %p192
      %p265 = pneg %p189
      %p266 = scmp.lt.s32.totalorder %s19, 2
      %s267 = scalar_select %p266, %s19, 2
      %s268 = scalar_lea.vmem %s7, %s267
      %s269 = smul.u32 2, %s19
      %p270 = scmp.lt.s32.totalorder %s269, 5
      %s271 = scalar_select %p270, %s269, 5
      %s272 = smul.addr %s271, 8
      %s273 = scalar_lea.vmem %s0, %s272
      %s274 = smul.u32 2, %s19
      %p275 = scmp.lt.s32.totalorder %s19, 2
      %s276 = scalar_select %p275, %s19, 2
      %s277 = scalar_lea.vmem %s7, %s276
      %v279 = vld [vmem:[%s273] sm:$0xff]
      %v280 = vld [vmem:[%s273 + $0x8] sm:$0xff]
      %v281 = vpack.c.bf16 %v280, %v279
      %v282 = vld [vmem:[%s1] sm:$0xf]
      %v283 = vld [vmem:[%s1 + $0x4] sm:$0xf]
      %v284 = vld [vmem:[%s1 + $0x8] sm:$0xf]
      %v285 = vld [vmem:[%s1 + $0xc] sm:$0xf]
      %v286 = vld [vmem:[%s2] sm:$0x1]
      %v288 = vlaneseq
      %v289 = vshrl.u32 %v288, 7
      %v290 = vsub.s32 0, %v289
      %v291 = vrot.slane %v286, %v290
      %v297 = vunpack.c.l.b16 %v282
      %v298 = vunpack.c.l.b16 %v283
      %v299 = vunpack.c.l.b16 %v284
      %v300 = vunpack.c.l.b16 %v285
      %v301 = vpack.c.b16 %v298, %v297
      %v302 = vpack.c.b16 %v300, %v299
      %vm305 = vcmask 261120
      %v307 = vsel %vm305, %v281, 0
      %309 = vmatprep.subr.bf16.mxu0 0
      %310 = vmatpush1.bf16.msra.mxu0 %v301
      %311 = vmatprep.subr.bf16.mxu0 0
      %312 = vmatpush1.bf16.msra.mxu0 %v302
      %313 = vmatprep.subr.bf16.mxu0 0
      %314 = vmatpush1.bf16.msra.mxu0 0
      %315 = vmatprep.subr.bf16.mxu0 0
      %316 = vmatpush1.bf16.msra.mxu0 0
      %317 = vmatprep.subr.bf16.mxu0 0
      %318 = vmatpush1.bf16.msra.mxu0 0
      %319 = vmatprep.subr.bf16.mxu0 0
      %320 = vmatpush1.bf16.msra.mxu0 0
      %321 = vmatprep.subr.bf16.mxu0 0
      %322 = vmatpush1.bf16.msra.mxu0 0
      %323 = vmatprep.subr.bf16.mxu0 0
      %324 = vmatpush1.bf16.msra.mxu0 0
      %325 = vmatprep.subr.bf16.mxu0 0
      %326 = vmatpush1.bf16.msra.mxu0 0
      %327 = vmatprep.subr.bf16.mxu0 0
      %328 = vmatpush1.bf16.msra.mxu0 0
      %329 = vmatprep.subr.bf16.mxu0 0
      %330 = vmatpush1.bf16.msra.mxu0 0
      %331 = vmatprep.subr.bf16.mxu0 0
      %332 = vmatpush1.bf16.msra.mxu0 0
      %333 = vmatprep.subr.bf16.mxu0 0
      %334 = vmatpush1.bf16.msra.mxu0 0
      %335 = vmatprep.subr.bf16.mxu0 0
      %336 = vmatpush1.bf16.msra.mxu0 0
      %337 = vmatprep.subr.bf16.mxu0 0
      %338 = vmatpush1.bf16.msra.mxu0 0
      %339 = vmatprep.subr.bf16.mxu0 0
      %340 = vmatpush1.bf16.msra.mxu0 0
      %341 = vmatprep.mubr.bf16.mxu0 0
      %342 = vmatmul.mubr.bf16.gmra.mrb[0].mxu0 %v307
      %v343 = vpop.f32.mrb[0].mxu0
      %v344 = vadd.f32 %v291, %v343
      %v345 = vpop.f32.mrb[0].mxu0
      %v346 = vpop.f32.mrb[0].mxu0
      %v347 = vadd.f32 %v291, %v346
      %v348 = vpop.f32.mrb[0].mxu0
      %349 = vdwg.mxu0
      %v350 = vmax.f32 %v344, 0.0
      %v351 = vmax.f32 %v347, 0.0
      %v352 = vpack.c.bf16 %v351, %v350
      %v353 = vld [vmem:[%s3] sm:$0xf]
      %v354 = vld [vmem:[%s3 + $0x4] sm:$0xf]
      %v355 = vld [vmem:[%s3 + $0x8] sm:$0xf]
      %v356 = vld [vmem:[%s3 + $0xc] sm:$0xf]
      %v357 = vld [vmem:[%s3 + $0x10] sm:$0xf]
      %v358 = vld [vmem:[%s3 + $0x14] sm:$0xf]
      %v359 = vld [vmem:[%s3 + $0x18] sm:$0xf]
      %v360 = vld [vmem:[%s3 + $0x1c] sm:$0xf]
      %v361 = vld [vmem:[%s3 + $0x20] sm:$0xf]
      %v362 = vld [vmem:[%s3 + $0x24] sm:$0xf]
      %v363 = vld [vmem:[%s3 + $0x28] sm:$0xf]
      %v364 = vld [vmem:[%s3 + $0x2c] sm:$0xf]
      %v365 = vld [vmem:[%s3 + $0x30] sm:$0xf]
      %v366 = vld [vmem:[%s3 + $0x34] sm:$0xf]
      %v367 = vld [vmem:[%s3 + $0x38] sm:$0xf]
      %v368 = vld [vmem:[%s3 + $0x3c] sm:$0xf]
      %v369 = vld [vmem:[%s4] sm:$0x1]
      %v371 = vlaneseq
      %v372 = vshrl.u32 %v371, 7
      %v373 = vsub.s32 0, %v372
      %v374 = vrot.slane %v369, %v373
      %v392 = vunpack.c.l.b16 %v353
      %v393 = vunpack.c.l.b16 %v354
      %v394 = vunpack.c.l.b16 %v355
      %v395 = vunpack.c.l.b16 %v356
      %v396 = vunpack.c.l.b16 %v357
      %v397 = vunpack.c.l.b16 %v358
      %v398 = vunpack.c.l.b16 %v359
      %v399 = vunpack.c.l.b16 %v360
      %v400 = vunpack.c.l.b16 %v361
      %v401 = vunpack.c.l.b16 %v362
      %v402 = vunpack.c.l.b16 %v363
      %v403 = vunpack.c.l.b16 %v364
      %v404 = vunpack.c.l.b16 %v365
      %v405 = vunpack.c.l.b16 %v366
      %v406 = vunpack.c.l.b16 %v367
      %v407 = vunpack.c.l.b16 %v368
      %v408 = vpack.c.b16 %v393, %v392
      %v409 = vpack.c.b16 %v395, %v394
      %v410 = vpack.c.b16 %v397, %v396
      %v411 = vpack.c.b16 %v399, %v398
      %v412 = vpack.c.b16 %v401, %v400
      %v413 = vpack.c.b16 %v403, %v402
      %v414 = vpack.c.b16 %v405, %v404
      %v415 = vpack.c.b16 %v407, %v406
      %424 = vmatprep.subr.bf16.mxu0 0
      %425 = vmatpush1.bf16.msra.mxu0 %v408
      %426 = vmatprep.subr.bf16.mxu0 0
      %427 = vmatpush1.bf16.msra.mxu0 %v409
      %428 = vmatprep.subr.bf16.mxu0 0
      %429 = vmatpush1.bf16.msra.mxu0 %v410
      %430 = vmatprep.subr.bf16.mxu0 0
      %431 = vmatpush1.bf16.msra.mxu0 %v411
      %432 = vmatprep.subr.bf16.mxu0 0
      %433 = vmatpush1.bf16.msra.mxu0 %v412
      %434 = vmatprep.subr.bf16.mxu0 0
      %435 = vmatpush1.bf16.msra.mxu0 %v413
      %436 = vmatprep.subr.bf16.mxu0 0
      %437 = vmatpush1.bf16.msra.mxu0 %v414
      %438 = vmatprep.subr.bf16.mxu0 0
      %439 = vmatpush1.bf16.msra.mxu0 %v415
      %440 = vmatprep.subr.bf16.mxu0 0
      %441 = vmatpush1.bf16.msra.mxu0 0
      %442 = vmatprep.subr.bf16.mxu0 0
      %443 = vmatpush1.bf16.msra.mxu0 0
      %444 = vmatprep.subr.bf16.mxu0 0
      %445 = vmatpush1.bf16.msra.mxu0 0
      %446 = vmatprep.subr.bf16.mxu0 0
      %447 = vmatpush1.bf16.msra.mxu0 0
      %448 = vmatprep.subr.bf16.mxu0 0
      %449 = vmatpush1.bf16.msra.mxu0 0
      %450 = vmatprep.subr.bf16.mxu0 0
      %451 = vmatpush1.bf16.msra.mxu0 0
      %452 = vmatprep.subr.bf16.mxu0 0
      %453 = vmatpush1.bf16.msra.mxu0 0
      %454 = vmatprep.subr.bf16.mxu0 0
      %455 = vmatpush1.bf16.msra.mxu0 0
      %456 = vmatprep.mubr.bf16.mxu0 0
      %457 = vmatmul.mubr.bf16.gmra.mrb[0].mxu0 %v352
      %v458 = vpop.f32.mrb[0].mxu0
      %v459 = vadd.f32 %v374, %v458
      %v460 = vpop.f32.mrb[0].mxu0
      %v461 = vpop.f32.mrb[0].mxu0
      %v462 = vadd.f32 %v374, %v461
      %v463 = vpop.f32.mrb[0].mxu0
      %464 = vdwg.mxu0
      %v465 = vmax.f32 %v459, 0.0
      %v466 = vmax.f32 %v462, 0.0
      %v467 = vld [vmem:[%s5] sm:$0x1]
      %v469 = vlaneseq
      %v470 = vshrl.u32 %v469, 7
      %v471 = vsub.s32 0, %v470
      %v472 = vrot.slane %v467, %v471
      %v474 = vmul.f32 %v465, %v472
      %v475 = vmul.f32 %v466, %v472
      %476 = vadd.xlane.f32.xlu0 %v474
      %v477 = vpop.xlane.xlu0 %476
      %478 = vadd.xlane.f32.xlu0 %v475
      %v479 = vpop.xlane.xlu0 %478
      %s480 = sld [smem:[#allocation2]]
      %v481 = vstv %s480
      %v482 = vadd.f32 %v477, %v481
      %v483 = vadd.f32 %v479, %v481
      %v484 = vsub.f32 0.0, %v482
      %v485 = vsub.f32 0.0, %v483
      %v486 = vmul.f32 %v484, 1.442695
      %v487 = vpow.pop %v486
      %v488 = vmul.f32 %v485, 1.442695
      %v489 = vpow.pop %v488
      %v490 = vadd.f32 %v487, 1.0
      %v491 = vadd.f32 %v489, 1.0
      %v492 = vrcp.pop %v490
      %v493 = vrcp.pop %v491
      %v496 = vlaneseq
      %v497 = vand.u32 %v496, 127
      %v498 = vlaneseq
      %v499 = vshrl.u32 %v498, 7
      %v500 = vsub.s32 %v497, %v499
      %v501 = vrot.slane %v492, %v500
      %v502 = vadd.s32 %v497, 4294967288
      %v503 = vlaneseq
      %v504 = vshrl.u32 %v503, 7
      %v505 = vsub.s32 %v502, %v504
      %v506 = vrot.slane %v493, %v505
      %vm507 = vcmask 130112
      %v508 = vsel %vm507, %v506, %v501
      %vm510 = vcmask 122880
      %511 = vst.msk [vmem:[%s277] sm:$0x1] %vm510, %v508
      %p512 = scmp.lt.s32.totalorder %s19, 2
      %s513 = scalar_select %p512, %s19, 2
      %s514 = scalar_lea.vmem %s7, %s513
      // Predicated region
      $region49: #{model_forward.1} parent=47 // pred_check
        %p515 = pneg %p189
      $region50: #{model_forward.1} parent=47 // pred_check_branch
        %517 = sbr.rel (%p515) target = $region52
      $region51: #{model_forward.1} parent=47 // pred_region
        _
      $region52: #{model_forward.1} parent=47 // pred_fallthru
        _
    $region48: #{model_forward.1} parent=5 // pred_fallthru
      _
    %p518 = scmp.le.s32.totalorder 2, %s14
    // Predicated region
    $region53: #{model_forward.1} parent=5 // pred_check
      %p519 = pneg %p518
    $region54: #{model_forward.1} parent=5 // pred_check_branch
      %521 = sbr.rel (%p519) target = $region56
    $region55: #{model_forward.1} parent=5 // pred_region
      %s522 = ssub.s32 %s14, 2
      // Predicated region
      $region57: #{model_forward.1} parent=55 // pred_check
        %p523 = pneg %p195
      $region58: #{model_forward.1} parent=55 // pred_check_branch
        %525 = sbr.rel (%p523) target = $region60
      $region59: #{model_forward.1} parent=55 // pred_region
        %p526 = scmp.lt.s32.totalorder %s20, 2
        %s527 = scalar_select %p526, %s20, 2
        %s528 = scalar_lea.vmem %s7, %s527
      $region60: #{model_forward.1} parent=55 // pred_fallthru
        _
    $region56: #{model_forward.1} parent=5 // pred_fallthru
      _
  $region6: #{model_forward.1} parent=0 // loop_footer
    %s18 = sadd.s32 1, %s14
  $region7: #{model_forward.1} parent=0 // loop_footer_branch
    %13 = sbr.rel target = $region3
  $region8: #{model_forward.1} parent=0 // loop_exit
    _

</llo_original>
